<compile_context>
chip_gen: v7x
topology: tpu7x:2x2x1
jax: 0.10.0
libtpu: 0.0.40
codegen_flags: <defaults>
</compile_context>

<pallas_src>
import jax
import jax.numpy as jnp
from jax import lax
from jax.experimental import pallas as pl
from jax.experimental.pallas import tpu as pltpu

LN_EPS = 1e-5


def _round_up(a, b):
    return (a + b - 1) // b * b


def _vmem_info():
    """Returns (physical per-core VMEM bytes, usable cap with headroom)."""
    try:
        info = pltpu.get_tpu_info()
        phys = int(getattr(info, "vmem_capacity_bytes", 0)) or (64 << 20)
    except Exception:  # conservative fallback (covers v7x's 64 MiB/TC)
        phys = 64 << 20
    cap = int(phys * 0.80)  # leave room for compiler-internal scratch
    return phys, cap


def _pick_tm(M, D, tile_budget_bytes, vmem_phys):
    """Token-tile size: large enough to amortize per-step overhead, small
    enough that the (double-buffered) x/out f32 tiles fit the budget."""
    if M <= 256:
        return M
    # Only go past 256 rows on big-VMEM chips (v5e/v6e: 128 MiB per core).
    max_tm = 512 if vmem_phys >= (96 << 20) else 256
    for cand in (512, 256, 128):
        if cand <= max_tm and cand <= M and 4 * cand * D * 4 <= tile_budget_bytes:
            return cand
    return 128


# ----------------------------------------------------------------------------
# Kernel 1: weights fully resident in VMEM, grid streams token tiles.
# ----------------------------------------------------------------------------
def _resident_kernel(x_ref, w1_ref, w2_ref, p_ref, o_ref):
    # x_ref: (TM, D) f32 token tile.  w1/w2: (D, D) bf16, resident across grid.
    # p_ref rows: 0=b1, 1=b2, 2=gamma, 3=beta (f32).
    x = x_ref[...]
    b1 = p_ref[0:1, :]
    b2 = p_ref[1:2, :]
    gamma = p_ref[2:3, :]
    beta = p_ref[3:4, :]

    # Linear 1 + ReLU (bf16 MXU inputs, f32 accumulation).
    h = jnp.dot(x.astype(jnp.bfloat16), w1_ref[...],
                preferred_element_type=jnp.float32) + b1
    h = jnp.maximum(h, 0.0)
    # Linear 2.
    y = jnp.dot(h.astype(jnp.bfloat16), w2_ref[...],
                preferred_element_type=jnp.float32) + b2

    # Residual + LayerNorm + ReLU, all f32.
    z = y + x
    mean = jnp.mean(z, axis=-1, keepdims=True)
    centered = z - mean
    var = jnp.mean(centered * centered, axis=-1, keepdims=True)
    zn = centered * lax.rsqrt(var + LN_EPS)
    o_ref[...] = jnp.maximum(zn * gamma + beta, 0.0).astype(o_ref.dtype)


# ----------------------------------------------------------------------------
# Kernel 2: K-blocked fallback for hidden sizes whose weights don't fit VMEM.
# Grid = (token tiles, k blocks); both matmuls are fused per k block:
#   acc += relu(x @ w1[:, k] + b1[k]) @ w2[k, :]
# ----------------------------------------------------------------------------
def _kblocked_kernel(x_ref, w1_ref, b1_ref, w2_ref, p_ref, o_ref, acc_ref):
    k = pl.program_id(1)

    @pl.when(k == 0)
    def _():
        acc_ref[...] = jnp.zeros_like(acc_ref)

    x = x_ref[...]
    hk = jnp.dot(x.astype(jnp.bfloat16), w1_ref[...],
                 preferred_element_type=jnp.float32) + b1_ref[...]
    hk = jnp.maximum(hk, 0.0)
    acc_ref[...] += jnp.dot(hk.astype(jnp.bfloat16), w2_ref[...],
                            preferred_element_type=jnp.float32)

    @pl.when(k == pl.num_programs(1) - 1)
    def _():
        b2 = p_ref[0:1, :]
        gamma = p_ref[1:2, :]
        beta = p_ref[2:3, :]
        z = acc_ref[...] + b2 + x
        mean = jnp.mean(z, axis=-1, keepdims=True)
        centered = z - mean
        var = jnp.mean(centered * centered, axis=-1, keepdims=True)
        zn = centered * lax.rsqrt(var + LN_EPS)
        o_ref[...] = jnp.maximum(zn * gamma + beta, 0.0).astype(o_ref.dtype)


def residual_block(x, w1, b1, w2, b2, gamma, beta, *, force_k_blocked=False):
    """x: (B, S, D) f32.  w1/w2: (D_in, D_out) (already transposed vs torch).
    b1/b2/gamma/beta: (D,)."""
    B, S, D = x.shape
    M = B * S
    x2 = x.reshape(M, D)          # free reshape; no padding / extra HBM pass

    vmem_phys, vmem_cap = _vmem_info()

    w1_bf = w1.astype(jnp.bfloat16)
    w2_bf = w2.astype(jnp.bfloat16)

    single = dict(pipeline_mode=pl.Buffered(buffer_count=1))  # resident operands

    resident_weight_bytes = 2 * D * D * 2  # both bf16 weights, single-buffered
    use_resident = (not force_k_blocked) and (
        resident_weight_bytes <= int(0.6 * vmem_cap))

    if use_resident:
        params = jnp.stack([b1, b2, gamma, beta], axis=0).astype(jnp.float32)
        TM = _pick_tm(M, D, vmem_cap - resident_weight_bytes, vmem_phys)
        num_tiles = pl.cdiv(M, TM)

        footprint = (resident_weight_bytes     # w1 + w2 (Buffered(1))
                     + 4 * D * 4               # packed b1/b2/gamma/beta
                     + 2 * TM * D * 4          # x tiles (double-buffered)
                     + 2 * TM * D * 4)         # out tiles (double-buffered)
        vmem_limit = min(max(int(1.5 * footprint) + (4 << 20), 16 << 20),
                         vmem_cap)

        cost = pl.CostEstimate(
            flops=4 * M * D * D,
            transcendentals=M,
            bytes_accessed=2 * M * D * 4 + resident_weight_bytes + 4 * D * 4,
        )

        out = pl.pallas_call(
            _resident_kernel,
            out_shape=jax.ShapeDtypeStruct((M, D), x.dtype),
            grid_spec=pltpu.PrefetchScalarGridSpec(
                num_scalar_prefetch=0,
                grid=(num_tiles,),
                in_specs=[
                    pl.BlockSpec((TM, D), lambda i: (i, 0)),          # x tiles
                    pl.BlockSpec((D, D), lambda i: (0, 0), **single),  # w1
                    pl.BlockSpec((D, D), lambda i: (0, 0), **single),  # w2
                    pl.BlockSpec((4, D), lambda i: (0, 0), **single),  # params
                ],
                out_specs=pl.BlockSpec((TM, D), lambda i: (i, 0)),
            ),
            compiler_params=pltpu.CompilerParams(
                dimension_semantics=("parallel",),   # token tiles independent
                vmem_limit_bytes=vmem_limit,
            ),
            cost_estimate=cost,
        )(x2, w1_bf, w2_bf, params)
        return out.reshape(B, S, D)

    # ---- K-blocked fallback: stream weight blocks over a reduction axis ----
    if D % 128 == 0:
        TK = 512 if D % 512 == 0 else (256 if D % 256 == 0 else 128)
        Dk = D
    else:
        TK = 128
        Dk = _round_up(D, 128)
    nkb = Dk // TK
    pad = Dk - D

    # Pad only the *inner* hidden index (one-time parameter plumbing): padded
    # w1 columns / b1 lanes are zero -> relu gives 0 there; padded w2 rows are
    # zero -> no contribution to the accumulator.
    w1p = jnp.pad(w1_bf, ((0, 0), (0, pad))) if pad else w1_bf          # (D, Dk)
    w2p = jnp.pad(w2_bf, ((0, pad), (0, 0))) if pad else w2_bf          # (Dk, D)
    b1p = (jnp.pad(b1, ((0, pad),)) if pad else b1).reshape(1, Dk)
    b1p = b1p.astype(jnp.float32)
    params2 = jnp.stack([b2, gamma, beta], axis=0).astype(jnp.float32)  # (3, D)

    block_bytes = 2 * (D * TK * 2 + TK * D * 2)  # double-buffered bf16 w blocks
    TM = _pick_tm(M, D, max(vmem_cap - block_bytes, 0), vmem_phys)
    num_tiles = pl.cdiv(M, TM)

    footprint = (block_bytes
                 + 2 * TM * D * 4       # x tiles
                 + 2 * TM * D * 4       # out tiles
                 + TM * D * 4           # f32 accumulator scratch
                 + 2 * TK * 4           # b1 blocks
                 + 3 * D * 4)           # b2/gamma/beta
    vmem_limit = min(max(int(1.5 * footprint) + (4 << 20), 16 << 20), vmem_cap)

    cost = pl.CostEstimate(
        flops=4 * M * D * Dk,
        transcendentals=M,
        bytes_accessed=2 * M * D * 4 + num_tiles * (2 * D * Dk * 2)
        + Dk * 4 + 3 * D * 4,
    )

    out = pl.pallas_call(
        _kblocked_kernel,
        out_shape=jax.ShapeDtypeStruct((M, D), x.dtype),
        grid_spec=pltpu.PrefetchScalarGridSpec(
            num_scalar_prefetch=0,
            grid=(num_tiles, nkb),
            in_specs=[
                pl.BlockSpec((TM, D), lambda i, k: (i, 0)),   # x (held across k)
                pl.BlockSpec((D, TK), lambda i, k: (0, k)),   # w1 column block
                pl.BlockSpec((1, TK), lambda i, k: (0, k)),   # b1 block
                pl.BlockSpec((TK, D), lambda i, k: (k, 0)),   # w2 row block
                pl.BlockSpec((3, D), lambda i, k: (0, 0), **single),
            ],
            out_specs=pl.BlockSpec((TM, D), lambda i, k: (i, 0)),
            scratch_shapes=[pltpu.VMEM((TM, D), jnp.float32)],
        ),
        compiler_params=pltpu.CompilerParams(
            dimension_semantics=("parallel", "arbitrary"),
            vmem_limit_bytes=vmem_limit,
        ),
        cost_estimate=cost,
    )(x2, w1p, b1p, w2p, params2)
    return out.reshape(B, S, D)


def _reference(x, w1, b1, w2, b2, gamma, beta):
    h = jnp.maximum(x @ w1 + b1, 0.0)
    y = h @ w2 + b2
    z = y + x
    mean = jnp.mean(z, axis=-1, keepdims=True)
    var = jnp.mean((z - mean) ** 2, axis=-1, keepdims=True)
    zn = (z - mean) / jnp.sqrt(var + LN_EPS)
    return jnp.maximum(zn * gamma + beta, 0.0)


if __name__ == "__main__":
    B, S, D = 2, 8, 32  # batch=2, seq=8, hidden_channels=32
    key = jax.random.PRNGKey(0)
    kx, k1, k2, k3, k4 = jax.random.split(key, 5)

    x = jax.random.normal(kx, (B, S, D), dtype=jnp.float32)
    # Deterministic synthetic parameters (not a checkpoint load).
    scale = float(1.0 / (D ** 0.5))
    w1 = jax.random.uniform(k1, (D, D), jnp.float32, -scale, scale)  # (in, out)
    b1 = jax.random.uniform(k2, (D,), jnp.float32, -scale, scale)
    w2 = jax.random.uniform(k3, (D, D), jnp.float32, -scale, scale)  # (in, out)
    b2 = jax.random.uniform(k4, (D,), jnp.float32, -scale, scale)
    gamma = jnp.ones((D,), jnp.float32)
    beta = jnp.zeros((D,), jnp.float32)

    ref = _reference(x, w1, b1, w2, b2, gamma, beta)

    # Default (weight-resident) path.
    out = jax.block_until_ready(residual_block(x, w1, b1, w2, b2, gamma, beta))
    assert out.shape == (B, S, D)
    # bf16 MXU inputs with f32 accumulation -> relaxed tolerance vs f32 ref.
    assert jnp.allclose(out, ref, atol=2e-2, rtol=2e-2), "resident path mismatch"

    # Also exercise the K-blocked fallback (used for large hidden sizes).
    out_kb = jax.block_until_ready(
        residual_block(x, w1, b1, w2, b2, gamma, beta, force_k_blocked=True))
    assert jnp.allclose(out_kb, ref, atol=2e-2, rtol=2e-2), "k-blocked path mismatch"

    print("KERNEL_OK")
</pallas_src>

<mosaic_0001>
module attributes {stable_mosaic.version = 11 : i64} {
  func.func @_resident_kernel(%arg0: i32, %arg1: memref<16x32xf32, #tpu.memory_space<vmem>>, %arg2: memref<32x32xbf16, #tpu.memory_space<vmem>>, %arg3: memref<32x32xbf16, #tpu.memory_space<vmem>>, %arg4: memref<4x32xf32, #tpu.memory_space<vmem>>, %arg5: memref<16x32xf32, #tpu.memory_space<vmem>>) attributes {dimension_semantics = [#tpu.dimension_semantics<parallel>], iteration_bounds = array<i64: 1>, scalar_prefetch = 0 : i64, scratch_operands = 0 : i64, tpu.core_type = #tpu.core_type<tc>, window_params = [{transform_indices = @transform_0, window_bounds = array<i64: 16, 32>}, {pipeline_mode = #tpu.pipeline_mode<synchronous>, transform_indices = @transform_1, window_bounds = array<i64: 32, 32>}, {pipeline_mode = #tpu.pipeline_mode<synchronous>, transform_indices = @transform_2, window_bounds = array<i64: 32, 32>}, {pipeline_mode = #tpu.pipeline_mode<synchronous>, transform_indices = @transform_3, window_bounds = array<i64: 4, 32>}, {transform_indices = @transform_4, window_bounds = array<i64: 16, 32>}]} {
    %c0 = arith.constant 0 : index
    %c0_0 = arith.constant 0 : index
    %0 = vector.load %arg1[%c0, %c0_0] : memref<16x32xf32, #tpu.memory_space<vmem>>, vector<16x32xf32>
    %c0_1 = arith.constant 0 : index
    %c0_2 = arith.constant 0 : index
    %1 = vector.load %arg4[%c0_1, %c0_2] : memref<4x32xf32, #tpu.memory_space<vmem>>, vector<1x32xf32>
    %c1 = arith.constant 1 : index
    %c0_3 = arith.constant 0 : index
    %2 = vector.load %arg4[%c1, %c0_3] : memref<4x32xf32, #tpu.memory_space<vmem>>, vector<1x32xf32>
    %c2 = arith.constant 2 : index
    %c0_4 = arith.constant 0 : index
    %3 = vector.load %arg4[%c2, %c0_4] : memref<4x32xf32, #tpu.memory_space<vmem>>, vector<1x32xf32>
    %c3 = arith.constant 3 : index
    %c0_5 = arith.constant 0 : index
    %4 = vector.load %arg4[%c3, %c0_5] : memref<4x32xf32, #tpu.memory_space<vmem>>, vector<1x32xf32>
    %5 = arith.truncf %0 : vector<16x32xf32> to vector<16x32xbf16>
    %c0_6 = arith.constant 0 : index
    %c0_7 = arith.constant 0 : index
    %6 = vector.load %arg2[%c0_6, %c0_7] : memref<32x32xbf16, #tpu.memory_space<vmem>>, vector<32x32xbf16>
    %cst = arith.constant dense<0.000000e+00> : vector<16x32xf32>
    %7 = tpu.matmul %5, %6, %cst {dimension_numbers = #tpu.dot_dimension_numbers<[1], [0], [0], [1], [0, 0, 1, 1], [], []>} : vector<16x32xbf16>, vector<32x32xbf16>, vector<16x32xf32> -> vector<16x32xf32>
    %8 = vector.broadcast %1 : vector<1x32xf32> to vector<16x32xf32>
    %9 = arith.addf %7, %8 : vector<16x32xf32>
    %cst_8 = arith.constant 0.000000e+00 : f32
    %10 = vector.broadcast %cst_8 : f32 to vector<16x32xf32>
    %11 = arith.maximumf %9, %10 : vector<16x32xf32>
    %12 = arith.truncf %11 : vector<16x32xf32> to vector<16x32xbf16>
    %c0_9 = arith.constant 0 : index
    %c0_10 = arith.constant 0 : index
    %13 = vector.load %arg3[%c0_9, %c0_10] : memref<32x32xbf16, #tpu.memory_space<vmem>>, vector<32x32xbf16>
    %cst_11 = arith.constant dense<0.000000e+00> : vector<16x32xf32>
    %14 = tpu.matmul %12, %13, %cst_11 {dimension_numbers = #tpu.dot_dimension_numbers<[1], [0], [0], [1], [0, 0, 1, 1], [], []>} : vector<16x32xbf16>, vector<32x32xbf16>, vector<16x32xf32> -> vector<16x32xf32>
    %15 = vector.broadcast %2 : vector<1x32xf32> to vector<16x32xf32>
    %16 = arith.addf %14, %15 : vector<16x32xf32>
    %17 = arith.addf %16, %0 : vector<16x32xf32>
    %cst_12 = arith.constant dense<0.000000e+00> : vector<16xf32>
    %18 = vector.multi_reduction <add>, %17, %cst_12 [1] : vector<16x32xf32> to vector<16xf32>
    %19 = vector.shape_cast %18 : vector<16xf32> to vector<16x1xf32>
    %cst_13 = arith.constant 3.200000e+01 : f32
    %20 = vector.broadcast %cst_13 : f32 to vector<16x1xf32>
    %21 = arith.divf %19, %20 : vector<16x1xf32>
    %22 = vector.broadcast %21 : vector<16x1xf32> to vector<16x32xf32>
    %23 = arith.subf %17, %22 : vector<16x32xf32>
    %24 = arith.mulf %23, %23 : vector<16x32xf32>
    %cst_14 = arith.constant dense<0.000000e+00> : vector<16xf32>
    %25 = vector.multi_reduction <add>, %24, %cst_14 [1] : vector<16x32xf32> to vector<16xf32>
    %26 = vector.shape_cast %25 : vector<16xf32> to vector<16x1xf32>
    %cst_15 = arith.constant 3.200000e+01 : f32
    %27 = vector.broadcast %cst_15 : f32 to vector<16x1xf32>
    %28 = arith.divf %26, %27 : vector<16x1xf32>
    %cst_16 = arith.constant 9.99999974E-6 : f32
    %29 = vector.broadcast %cst_16 : f32 to vector<16x1xf32>
    %30 = arith.addf %28, %29 : vector<16x1xf32>
    %31 = math.rsqrt %30 : vector<16x1xf32>
    %32 = vector.broadcast %31 : vector<16x1xf32> to vector<16x32xf32>
    %33 = arith.mulf %23, %32 : vector<16x32xf32>
    %34 = vector.broadcast %3 : vector<1x32xf32> to vector<16x32xf32>
    %35 = arith.mulf %33, %34 : vector<16x32xf32>
    %36 = vector.broadcast %4 : vector<1x32xf32> to vector<16x32xf32>
    %37 = arith.addf %35, %36 : vector<16x32xf32>
    %cst_17 = arith.constant 0.000000e+00 : f32
    %38 = vector.broadcast %cst_17 : f32 to vector<16x32xf32>
    %39 = arith.maximumf %37, %38 : vector<16x32xf32>
    %c0_18 = arith.constant 0 : index
    %c0_19 = arith.constant 0 : index
    %40 = vector.load %arg5[%c0_18, %c0_19] : memref<16x32xf32, #tpu.memory_space<vmem>>, vector<16x32xf32>
    tpu.vector_store %arg5[%c0_18, %c0_19], %39 {strides = array<i32>} : memref<16x32xf32, #tpu.memory_space<vmem>>, vector<16x32xf32>,
    return
  }
  func.func @transform_0(%arg0: i32) -> (i32, i32) {
    %c0_i32 = arith.constant 0 : i32
    %c0_i32_0 = arith.constant 0 : i32
    return %arg0, %c0_i32 : i32, i32
  }
  func.func @transform_1(%arg0: i32) -> (i32, i32) {
    %c0_i32 = arith.constant 0 : i32
    %c0_i32_0 = arith.constant 0 : i32
    %c0_i32_1 = arith.constant 0 : i32
    return %c0_i32, %c0_i32_0 : i32, i32
  }
  func.func @transform_2(%arg0: i32) -> (i32, i32) {
    %c0_i32 = arith.constant 0 : i32
    %c0_i32_0 = arith.constant 0 : i32
    %c0_i32_1 = arith.constant 0 : i32
    return %c0_i32, %c0_i32_0 : i32, i32
  }
  func.func @transform_3(%arg0: i32) -> (i32, i32) {
    %c0_i32 = arith.constant 0 : i32
    %c0_i32_0 = arith.constant 0 : i32
    %c0_i32_1 = arith.constant 0 : i32
    return %c0_i32, %c0_i32_0 : i32, i32
  }
  func.func @transform_4(%arg0: i32) -> (i32, i32) {
    %c0_i32 = arith.constant 0 : i32
    %c0_i32_0 = arith.constant 0 : i32
    return %arg0, %c0_i32 : i32, i32
  }
}

</mosaic_0001>

<llo_original>
// kernel: tpu_custom_call.1
$region0: #{tpu_custom_call.1}
  #allocation0 [shape = 'u32[]', space=smem, size = 0x4, offset = 0x4, fixed_abs, tag = 'smem constant byte address 0x4 - core index']
  #allocation1 [shape = 'u32[144,128]{1,0:T(1,128)}', space=vmem, size = 0x12000, scoped, tag = 'internal scratch']
  %s0 = inlined_call_operand.hbm [shape: f32[16,32], index: 0, kind: input, shape index: {}]
  %s1 = inlined_call_operand.hbm [shape: bf16[32,32], index: 1, kind: input, shape index: {}]
  %s2 = inlined_call_operand.hbm [shape: bf16[32,32], index: 2, kind: input, shape index: {}]
  %s3 = inlined_call_operand.vmem [shape: f32[4,32], index: 3, kind: input, shape index: {}]
  %s4 = inlined_call_operand.hbm [shape: f32[16,32], index: 4, kind: output, shape index: {}]
  %s5 = sld [smem:[#allocation0]]
  $region38: #{tpu_custom_call.1} parent=0
    _
  %s7 = ssub.s32 1, %s5
  %s8 = scalar_select 0, %s7, %s5
  $region1: #{tpu_custom_call.1} parent=0
    #allocation2 [shape = 'u8[8192]{0}', space=vmem, size = 0x2000, scoped, tag = 'input window, operand 0, single buffered']
    #allocation3 [shape = 's32[1]{0}', space=sflag, size = 0x4, scoped, tag = 'scoped memory for tpu_custom_call.1']
    #allocation4 [shape = 's32[1]{0}', space=sflag, size = 0x4, scoped, tag = 'scoped memory for tpu_custom_call.1']
    #allocation5 [shape = 'u8[8192]{0}', space=vmem, size = 0x2000, scoped, tag = 'input window, operand 1, single buffered']
    #allocation6 [shape = 's32[1]{0}', space=sflag, size = 0x4, scoped, tag = 'scoped memory for tpu_custom_call.1']
    #allocation7 [shape = 'u8[8192]{0}', space=vmem, size = 0x2000, scoped, tag = 'input window, operand 2, single buffered']
    #allocation8 [shape = 'u8[8192]{0}', space=vmem, size = 0x2000, scoped, tag = 'output window, operand 0, single buffered']
    %9 = vsyncpa [#allocation3], 0
    %10 = vsyncpa [#allocation6], 0
    %11 = vsyncpa [#allocation4], 0
    // Predicated region
    $region2: #{tpu_custom_call.1} parent=1 // pred_check
      _
    $region3: #{tpu_custom_call.1} parent=1 // pred_check_branch
      %13 = sbr.rel (0) target = $region5
    $region4: #{tpu_custom_call.1} parent=1 // pred_region
      %s15 = ssub.s32 256, 256
      %16 = vsyncadd [#allocation3], %s15
      %s17 = sshll.u32 [#allocation2], 4
      %s18 = int_to_ptr.vmem [resolvable:$true] %s17
      %23 = dma.hbm_to_vmem [thread:$0]  %s0, 256, %s18, [#allocation3], 128, 128, 8
    $region5: #{tpu_custom_call.1} parent=1 // pred_fallthru
      _
    // Predicated region
    $region6: #{tpu_custom_call.1} parent=1 // pred_check
      _
    $region7: #{tpu_custom_call.1} parent=1 // pred_check_branch
      %25 = sbr.rel (0) target = $region9
    $region8: #{tpu_custom_call.1} parent=1 // pred_region
      %s27 = ssub.s32 256, 256
      %28 = vsyncadd [#allocation6], %s27
      %s29 = sshll.u32 [#allocation5], 4
      %s30 = int_to_ptr.vmem [resolvable:$true] %s29
      %35 = dma.hbm_to_vmem [thread:$0]  %s1, 256, %s30, [#allocation6], 64, 64, 4
    $region9: #{tpu_custom_call.1} parent=1 // pred_fallthru
      _
    // Predicated region
    $region10: #{tpu_custom_call.1} parent=1 // pred_check
      _
    $region11: #{tpu_custom_call.1} parent=1 // pred_check_branch
      %37 = sbr.rel (0) target = $region13
    $region12: #{tpu_custom_call.1} parent=1 // pred_region
      %s39 = ssub.s32 256, 256
      %40 = vsyncadd [#allocation6], %s39
      %s41 = sshll.u32 [#allocation7], 4
      %s42 = int_to_ptr.vmem [resolvable:$true] %s41
      %47 = dma.hbm_to_vmem [thread:$0]  %s2, 256, %s42, [#allocation6], 64, 64, 4
    $region13: #{tpu_custom_call.1} parent=1 // pred_fallthru
      _
    // Predicated region
    $region14: #{tpu_custom_call.1} parent=1 // pred_check
      _
    $region15: #{tpu_custom_call.1} parent=1 // pred_check_branch
      %49 = sbr.rel (0) target = $region17
    $region16: #{tpu_custom_call.1} parent=1 // pred_region
      _
    $region17: #{tpu_custom_call.1} parent=1 // pred_fallthru
      _
    // Predicated region
    $region18: #{tpu_custom_call.1} parent=1 // pred_check
      _
    $region19: #{tpu_custom_call.1} parent=1 // pred_check_branch
      %51 = sbr.rel (0) target = $region21
    $region20: #{tpu_custom_call.1} parent=1 // pred_region
      %52 = dma.done [#allocation3], 256
    $region21: #{tpu_custom_call.1} parent=1 // pred_fallthru
      _
    // Predicated region
    $region22: #{tpu_custom_call.1} parent=1 // pred_check
      _
    $region23: #{tpu_custom_call.1} parent=1 // pred_check_branch
      %54 = sbr.rel (0) target = $region25
    $region24: #{tpu_custom_call.1} parent=1 // pred_region
      %55 = dma.done [#allocation6], 256
    $region25: #{tpu_custom_call.1} parent=1 // pred_fallthru
      _
    // Predicated region
    $region26: #{tpu_custom_call.1} parent=1 // pred_check
      _
    $region27: #{tpu_custom_call.1} parent=1 // pred_check_branch
      %57 = sbr.rel (0) target = $region29
    $region28: #{tpu_custom_call.1} parent=1 // pred_region
      %58 = dma.done [#allocation6], 256
    $region29: #{tpu_custom_call.1} parent=1 // pred_fallthru
      _
    %v60 = vld [vmem:[#allocation2] sm:$0xff]
    %v61 = vld [vmem:[#allocation2 + $0x8] sm:$0xff]
    %v62 = vld [vmem:[%s3] sm:$0x1]
    %v63 = vld [vmem:[%s3 + $0x1] sm:$0x1]
    %v64 = vld [vmem:[%s3 + $0x2] sm:$0x1]
    %v65 = vld [vmem:[%s3 + $0x3] sm:$0x1]
    %v66 = vpack.c.bf16 %v61, %v60
    %v67 = vld [vmem:[#allocation5] sm:$0xf]
    %v68 = vld [vmem:[#allocation5 + $0x4] sm:$0xf]
    %v69 = vld [vmem:[#allocation5 + $0x8] sm:$0xf]
    %v70 = vld [vmem:[#allocation5 + $0xc] sm:$0xf]
    %v71 = vlaneseq
    %v72 = vshrl.u32 %v71, 7
    %v73 = vsub.s32 0, %v72
    %v74 = vrot.slane %v62, %v73
    %v79 = vunpack.c.l.b16 %v67
    %v80 = vunpack.c.l.b16 %v68
    %v81 = vunpack.c.l.b16 %v69
    %v82 = vunpack.c.l.b16 %v70
    %v83 = vpack.c.b16 %v80, %v79
    %v84 = vpack.c.b16 %v82, %v81
    %vm87 = vcmask 261120
    %v89 = vsel %vm87, %v66, 0
    %91 = vmatprep.subr.bf16.mxu0 0
    %92 = vmatpush1.bf16.msra.mxu0 %v83
    %93 = vmatprep.subr.bf16.mxu0 0
    %94 = vmatpush1.bf16.msra.mxu0 %v84
    %95 = vmatprep.subr.bf16.mxu0 0
    %96 = vmatpush1.bf16.msra.mxu0 0
    %97 = vmatprep.subr.bf16.mxu0 0
    %98 = vmatpush1.bf16.msra.mxu0 0
    %99 = vmatprep.subr.bf16.mxu0 0
    %100 = vmatpush1.bf16.msra.mxu0 0
    %101 = vmatprep.subr.bf16.mxu0 0
    %102 = vmatpush1.bf16.msra.mxu0 0
    %103 = vmatprep.subr.bf16.mxu0 0
    %104 = vmatpush1.bf16.msra.mxu0 0
    %105 = vmatprep.subr.bf16.mxu0 0
    %106 = vmatpush1.bf16.msra.mxu0 0
    %107 = vmatprep.subr.bf16.mxu0 0
    %108 = vmatpush1.bf16.msra.mxu0 0
    %109 = vmatprep.subr.bf16.mxu0 0
    %110 = vmatpush1.bf16.msra.mxu0 0
    %111 = vmatprep.subr.bf16.mxu0 0
    %112 = vmatpush1.bf16.msra.mxu0 0
    %113 = vmatprep.subr.bf16.mxu0 0
    %114 = vmatpush1.bf16.msra.mxu0 0
    %115 = vmatprep.subr.bf16.mxu0 0
    %116 = vmatpush1.bf16.msra.mxu0 0
    %117 = vmatprep.subr.bf16.mxu0 0
    %118 = vmatpush1.bf16.msra.mxu0 0
    %119 = vmatprep.subr.bf16.mxu0 0
    %120 = vmatpush1.bf16.msra.mxu0 0
    %121 = vmatprep.subr.bf16.mxu0 0
    %122 = vmatpush1.bf16.msra.mxu0 0
    %123 = vmatprep.mubr.bf16.mxu0 0
    %124 = vmatmul.mubr.bf16.gmra.mrb[0].mxu0 %v89
    %v125 = vpop.f32.mrb[0].mxu0
    %v126 = vadd.f32 %v74, %v125
    %v127 = vpop.f32.mrb[0].mxu0
    %v128 = vpop.f32.mrb[0].mxu0
    %v129 = vadd.f32 %v74, %v128
    %v130 = vpop.f32.mrb[0].mxu0
    %131 = vdwg.mxu0
    %v132 = vmax.f32 %v126, 0.0
    %v133 = vmax.f32 %v129, 0.0
    %v134 = vpack.c.bf16 %v133, %v132
    %v135 = vld [vmem:[#allocation7] sm:$0xf]
    %v136 = vld [vmem:[#allocation7 + $0x4] sm:$0xf]
    %v137 = vld [vmem:[#allocation7 + $0x8] sm:$0xf]
    %v138 = vld [vmem:[#allocation7 + $0xc] sm:$0xf]
    %v139 = vlaneseq
    %v140 = vshrl.u32 %v139, 7
    %v141 = vsub.s32 0, %v140
    %v142 = vrot.slane %v63, %v141
    %v147 = vunpack.c.l.b16 %v135
    %v148 = vunpack.c.l.b16 %v136
    %v149 = vunpack.c.l.b16 %v137
    %v150 = vunpack.c.l.b16 %v138
    %v151 = vpack.c.b16 %v148, %v147
    %v152 = vpack.c.b16 %v150, %v149
    %v156 = vsel %vm87, %v134, 0
    %158 = vmatprep.subr.bf16.mxu0 0
    %159 = vmatpush1.bf16.msra.mxu0 %v151
    %160 = vmatprep.subr.bf16.mxu0 0
    %161 = vmatpush1.bf16.msra.mxu0 %v152
    %162 = vmatprep.subr.bf16.mxu0 0
    %163 = vmatpush1.bf16.msra.mxu0 0
    %164 = vmatprep.subr.bf16.mxu0 0
    %165 = vmatpush1.bf16.msra.mxu0 0
    %166 = vmatprep.subr.bf16.mxu0 0
    %167 = vmatpush1.bf16.msra.mxu0 0
    %168 = vmatprep.subr.bf16.mxu0 0
    %169 = vmatpush1.bf16.msra.mxu0 0
    %170 = vmatprep.subr.bf16.mxu0 0
    %171 = vmatpush1.bf16.msra.mxu0 0
    %172 = vmatprep.subr.bf16.mxu0 0
    %173 = vmatpush1.bf16.msra.mxu0 0
    %174 = vmatprep.subr.bf16.mxu0 0
    %175 = vmatpush1.bf16.msra.mxu0 0
    %176 = vmatprep.subr.bf16.mxu0 0
    %177 = vmatpush1.bf16.msra.mxu0 0
    %178 = vmatprep.subr.bf16.mxu0 0
    %179 = vmatpush1.bf16.msra.mxu0 0
    %180 = vmatprep.subr.bf16.mxu0 0
    %181 = vmatpush1.bf16.msra.mxu0 0
    %182 = vmatprep.subr.bf16.mxu0 0
    %183 = vmatpush1.bf16.msra.mxu0 0
    %184 = vmatprep.subr.bf16.mxu0 0
    %185 = vmatpush1.bf16.msra.mxu0 0
    %186 = vmatprep.subr.bf16.mxu0 0
    %187 = vmatpush1.bf16.msra.mxu0 0
    %188 = vmatprep.subr.bf16.mxu0 0
    %189 = vmatpush1.bf16.msra.mxu0 0
    %190 = vmatprep.mubr.bf16.mxu0 0
    %191 = vmatmul.mubr.bf16.gmra.mrb[0].mxu0 %v156
    %v192 = vpop.f32.mrb[0].mxu0
    %v193 = vadd.f32 %v142, %v192
    %v194 = vpop.f32.mrb[0].mxu0
    %v195 = vpop.f32.mrb[0].mxu0
    %v196 = vadd.f32 %v142, %v195
    %v197 = vpop.f32.mrb[0].mxu0
    %198 = vdwg.mxu0
    %v199 = vadd.f32 %v193, %v60
    %v200 = vadd.f32 %v196, %v61
    %v201 = vsel %vm87, %v199, 0.0
    %202 = vadd.xlane.f32.xlu0 %v201
    %v203 = vpop.xlane.xlu0 %202
    %v204 = vsel %vm87, %v200, 0.0
    %205 = vadd.xlane.f32.xlu0 %v204
    %v206 = vpop.xlane.xlu0 %205
    %v207 = vrcp.pop 32.0
    %v208 = vmul.f32 %v203, %v207
    %v209 = vmul.f32 %v206, %v207
    %v210 = vsub.f32 %v199, %v208
    %v211 = vsub.f32 %v200, %v209
    %v212 = vmul.f32 %v210, %v210
    %v213 = vmul.f32 %v211, %v211
    %v214 = vsel %vm87, %v212, 0.0
    %215 = vadd.xlane.f32.xlu0 %v214
    %v216 = vpop.xlane.xlu0 %215
    %v217 = vsel %vm87, %v213, 0.0
    %218 = vadd.xlane.f32.xlu0 %v217
    %v219 = vpop.xlane.xlu0 %218
    %v220 = vmul.f32 %v216, %v207
    %v221 = vmul.f32 %v219, %v207
    %v222 = vadd.f32 %v220, 1e-05
    %v223 = vadd.f32 %v221, 1e-05
    %v224 = vrsqrt.pop %v222
    %v225 = vrsqrt.pop %v223
    %v226 = vmul.f32 %v210, %v224
    %v227 = vmul.f32 %v211, %v225
    %v228 = vlaneseq
    %v229 = vshrl.u32 %v228, 7
    %v230 = vsub.s32 0, %v229
    %v231 = vrot.slane %v64, %v230
    %v232 = vmul.f32 %v226, %v231
    %v233 = vmul.f32 %v227, %v231
    %v234 = vlaneseq
    %v235 = vshrl.u32 %v234, 7
    %v236 = vsub.s32 0, %v235
    %v237 = vrot.slane %v65, %v236
    %v238 = vadd.f32 %v232, %v237
    %v239 = vadd.f32 %v233, %v237
    %v240 = vmax.f32 %v238, 0.0
    %v241 = vmax.f32 %v239, 0.0
    %242 = vst.msk [vmem:[#allocation8] sm:$0xff] %vm87, %v240
    %243 = vst.msk [vmem:[#allocation8 + $0x8] sm:$0xff] %vm87, %v241
    // Predicated region
    $region30: #{tpu_custom_call.1} parent=1 // pred_check
      _
    $region31: #{tpu_custom_call.1} parent=1 // pred_check_branch
      %245 = sbr.rel (0) target = $region33
    $region32: #{tpu_custom_call.1} parent=1 // pred_region
      %s247 = ssub.s32 256, 256
      %248 = vsyncadd [#allocation4], %s247
      %s249 = sshll.u32 [#allocation8], 4
      %s250 = int_to_ptr.vmem [resolvable:$true] %s249
      %255 = dma.vmem_to_hbm [thread:$0]  %s250, 256, %s4, [#allocation4], 128, 128, 8
    $region33: #{tpu_custom_call.1} parent=1 // pred_fallthru
      _
    // Predicated region
    $region34: #{tpu_custom_call.1} parent=1 // pred_check
      _
    $region35: #{tpu_custom_call.1} parent=1 // pred_check_branch
      %257 = sbr.rel (0) target = $region37
    $region36: #{tpu_custom_call.1} parent=1 // pred_region
      %258 = dma.done [#allocation4], 256
    $region37: #{tpu_custom_call.1} parent=1 // pred_fallthru
      _
    %259 = vsyncpa [#allocation3], 1
    %260 = vsyncpa [#allocation6], 1
    %261 = vsyncpa [#allocation4], 1

</llo_original>
